<compile_context>
chip_gen: v7x
topology: tpu7x:2x2x1
jax: 0.10.0
libtpu: 0.0.40
codegen_flags: <defaults>
</compile_context>

<pallas_src>
import functools
import math

import jax
import jax.numpy as jnp
from jax.experimental import pallas as pl
from jax.experimental.pallas import tpu as pltpu

_SMOOTH = 1.0
_EPS = 1e-3
_LANE = 128
_SUB = 8
_CHUNK_ROWS = 256  # rows per in-kernel chunk: 256*128*4B = 128 KiB per f32 temp


def _round_up(v, m):
    return ((v + m - 1) // m) * m


def _tpu_generation():
    try:
        kind = jax.devices()[0].device_kind.lower()
    except Exception:
        return 0
    for gen in (5, 6, 7):
        if f"v{gen}" in kind or f"tpu{gen}" in kind:
            return gen
    return 0


def _dice_focal_kernel(x_ref, t_ref, out_ref, acc_ref, *,
                       gamma, binary_targets, tile_r, kb_per_split,
                       r_valid, needs_mask, n_full_chunks, tail_rows):
    kj = pl.program_id(2)

    @pl.when(kj == 0)
    def _init():
        acc_ref[...] = jnp.zeros_like(acc_ref)

    block_row0 = (pl.program_id(1) * kb_per_split + kj) * tile_r

    def powg(v):
        # gamma is a static Python int -> stays on the VPU, off the EUP.
        if gamma == 1:
            return v
        if gamma == 2:
            return v * v
        if gamma == 3:
            return v * v * v
        return jnp.power(v, jnp.float32(gamma))

    def fold(v):
        # (nrows, 128) -> (8, 128): pure VPU adds; lane reduction happens once
        # in the tiny JAX epilogue.
        return jnp.sum(v.reshape(-1, _SUB, _LANE), axis=0)

    def process(row0, nrows):
        x = x_ref[0, pl.ds(row0, nrows), :].astype(jnp.float32)
        t = t_ref[0, pl.ds(row0, nrows), :].astype(jnp.float32)
        if needs_mask:
            # Boundary blocks: rows at/after r_valid contain unspecified data.
            lim = r_valid - block_row0 - row0
            row_id = jax.lax.broadcasted_iota(jnp.int32, (nrows, _LANE), 0)
            valid = row_id < lim
            x = jnp.where(valid, x, 0.0)
            t = jnp.where(valid, t, 0.0)
        xc = jnp.clip(x, _EPS, 1.0 - _EPS)
        if binary_targets:
            # Exact for t in {0, 1}: one log per element, and t*t == t.
            p_t = jnp.where(t > 0.5, xc, 1.0 - xc)
            focal = -powg(1.0 - p_t) * jnp.log(p_t)
            t_sq = t
        else:
            focal = -(t * powg(1.0 - xc) * jnp.log(xc)
                      + (1.0 - t) * powg(xc) * jnp.log(1.0 - xc))
            t_sq = t * t
        if needs_mask:
            focal = jnp.where(valid, focal, 0.0)
        acc_ref[0] += fold(x * t)
        acc_ref[1] += fold(x * x + t_sq)   # merged union accumulator
        acc_ref[2] += fold(focal)

    if n_full_chunks == 1:
        process(0, _CHUNK_ROWS)
    elif n_full_chunks > 1:
        def body(c, carry):
            process(pl.multiple_of(c * _CHUNK_ROWS, _CHUNK_ROWS), _CHUNK_ROWS)
            return carry
        jax.lax.fori_loop(0, n_full_chunks, body, 0)
    if tail_rows:
        process(n_full_chunks * _CHUNK_ROWS, tail_rows)

    @pl.when(kj == pl.num_programs(2) - 1)
    def _finalize():
        out_ref[0] = acc_ref[...]


def dice_and_focal_loss(inp, target, gamma: int = 2,
                        binary_targets=None, block_bytes=None):
    """Equivalent to Dice_and_FocalLoss()(input, target) from the PyTorch code."""
    assert inp.shape == target.shape
    b = inp.shape[0]
    d = math.prod(inp.shape[1:])
    assert d > 0

    if binary_targets is None:
        binary_targets = bool(jnp.issubdtype(target.dtype, jnp.integer)
                              or jnp.issubdtype(target.dtype, jnp.bool_))

    gen = _tpu_generation()
    if block_bytes is None:
        # Bigger streaming tiles on v5e/v6e (128 MiB VMEM); capped on v7x (64 MiB).
        block_bytes = 4 * 1024 * 1024 if gen in (5, 6) else 2 * 1024 * 1024
    vmem_limit = 64 * 1024 * 1024 if gen in (5, 6) else 48 * 1024 * 1024

    # --- lane-dense (B, R, 128) view; pad only in the ragged-D fallback ------
    r_raw = -(-d // _LANE)
    zero_copy = (d % _LANE == 0) and (r_raw % _SUB == 0)
    r_rows = r_raw if zero_copy else _round_up(r_raw, _SUB)
    pad_elems = r_rows * _LANE - d

    # --- wire dtypes: native floats; bool/int targets as int8 when legal -----
    if not jnp.issubdtype(inp.dtype, jnp.floating):
        inp = inp.astype(jnp.float32)
    if not jnp.issubdtype(target.dtype, jnp.floating):
        target = target.astype(jnp.int8 if (r_rows % 32 == 0) else jnp.float32)

    x2d = inp.reshape(b, d)
    t2d = target.reshape(b, d)
    if not zero_copy:
        # Ragged D: one unavoidable pad copy; focal of the zero pads is
        # corrected analytically in the epilogue.
        x2d = jnp.pad(x2d, ((0, 0), (0, pad_elems)))
        t2d = jnp.pad(t2d, ((0, 0), (0, pad_elems)))
    x3 = x2d.reshape(b, r_rows, _LANE)
    t3 = t2d.reshape(b, r_rows, _LANE)

    # --- tiling ---------------------------------------------------------------
    itemsize = max(x3.dtype.itemsize, t3.dtype.itemsize)
    cap = max(_CHUNK_ROWS,
              (block_bytes // (_LANE * itemsize)) // _CHUNK_ROWS * _CHUNK_ROWS)
    if r_rows <= cap:
        tile_r, kb = r_rows, 1
    else:
        tile_r, kb = cap, -(-r_rows // cap)
    needs_mask = (r_rows % tile_r) != 0
    n_full_chunks, tail_rows = divmod(tile_r, _CHUNK_ROWS)

    # Optional reduction-axis split so both v7x TensorCores stay busy at
    # small / odd batch sizes.
    n_split = 2 if (b % 2 == 1 and kb % 2 == 0 and kb >= 2) else 1
    kb_per = kb // n_split

    kernel = functools.partial(
        _dice_focal_kernel, gamma=gamma, binary_targets=binary_targets,
        tile_r=tile_r, kb_per_split=kb_per, r_valid=r_rows,
        needs_mask=needs_mask, n_full_chunks=n_full_chunks, tail_rows=tail_rows)

    in_spec = pl.BlockSpec((1, tile_r, _LANE),
                           lambda bi, si, kj: (bi, si * kb_per + kj, 0))
    out_spec = pl.BlockSpec((1, 3, _SUB, _LANE),
                            lambda bi, si, kj: (bi * n_split + si, 0, 0, 0))

    n_elem = b * kb * tile_r * _LANE
    cost = pl.CostEstimate(
        flops=18 * n_elem,
        transcendentals=(1 if binary_targets else 2) * n_elem,
        bytes_accessed=b * r_rows * _LANE * (x3.dtype.itemsize + t3.dtype.itemsize)
        + b * n_split * 3 * _SUB * _LANE * 4,
    )

    parts = pl.pallas_call(
        kernel,
        out_shape=jax.ShapeDtypeStruct((b * n_split, 3, _SUB, _LANE), jnp.float32),
        grid_spec=pltpu.PrefetchScalarGridSpec(
            num_scalar_prefetch=0,
            grid=(b, n_split, kb_per),
            in_specs=[in_spec, in_spec],
            out_specs=out_spec,
            scratch_shapes=[pltpu.VMEM((3, _SUB, _LANE), jnp.float32)],
        ),
        compiler_params=pltpu.CompilerParams(
            dimension_semantics=("parallel", "parallel", "arbitrary"),
            vmem_limit_bytes=vmem_limit,
        ),
        cost_estimate=cost,
    )(x3, t3)

    # --- tiny JAX epilogue: cross-lane reduction + loss combination ----------
    sums = jnp.sum(parts.reshape(b, n_split, 3, _SUB * _LANE), axis=(1, 3))  # (B, 3)
    intersect, union, focal_per = sums[:, 0], sums[:, 1], sums[:, 2]
    dice = jnp.mean(1.0 - (2.0 * intersect + _SMOOTH) / (union + _SMOOTH))

    focal_sum = jnp.sum(focal_per)
    if pad_elems:
        # Each zero-padded element (x=0, t=0) adds -(eps**gamma)*log(1-eps)
        # to the focal sum and 0 to the dice sums.
        pad_c = -(_EPS ** gamma) * math.log(1.0 - _EPS)
        focal_sum = focal_sum - jnp.float32(b * pad_elems * pad_c)
    focal = focal_sum / jnp.float32(b * d)
    return dice + focal


def _reference(inp, target, gamma: int = 2):
    # Pure-JAX reference mirroring the PyTorch loss exactly.
    x = inp.astype(jnp.float32)
    t = target.astype(jnp.float32)
    axes = tuple(range(1, x.ndim))
    intersect = jnp.sum(x * t, axis=axes)
    union = jnp.sum(x ** 2, axis=axes) + jnp.sum(t ** 2, axis=axes)
    dice = jnp.mean(1.0 - (2.0 * intersect + _SMOOTH) / (union + _SMOOTH))
    xc = jnp.clip(x, _EPS, 1.0 - _EPS)
    focal = jnp.mean(-(t * (1.0 - xc) ** gamma * jnp.log(xc)
                       + (1.0 - t) * xc ** gamma * jnp.log(1.0 - xc)))
    return dice + focal


if __name__ == "__main__":
    key = jax.random.PRNGKey(0)
    ks = jax.random.split(key, 9)

    def check(got, want, name):
        got = jax.block_until_ready(got)
        want = jax.block_until_ready(want)
        assert jnp.allclose(got, want, rtol=1e-5, atol=1e-5), (name, got, want)

    # 1) soft (float) targets, D % 128 == 0 -> zero-copy reshape, two-log path.
    x1 = jax.random.uniform(ks[0], (2, 4, 16, 16), dtype=jnp.float32)
    t1 = (jax.random.uniform(ks[1], (2, 4, 16, 16)) > 0.5).astype(jnp.float32)
    check(dice_and_focal_loss(x1, t1), _reference(x1, t1), "float-targets")

    # 2) bool targets -> auto single-log focal path.
    t2 = jax.random.uniform(ks[2], (2, 4, 16, 16)) > 0.5
    check(dice_and_focal_loss(x1, t2), _reference(x1, t2.astype(jnp.float32)),
          "bool-targets")

    # 3) ragged feature count -> pad fallback + exact analytic focal correction.
    x3_ = jax.random.uniform(ks[3], (2, 3, 10, 10), dtype=jnp.float32)
    t3_ = (jax.random.uniform(ks[4], (2, 3, 10, 10)) > 0.5).astype(jnp.float32)
    check(dice_and_focal_loss(x3_, t3_), _reference(x3_, t3_), "ragged-D")

    # 4) batch 1, multi-block reduction, int8 target wire -> parallel K split.
    x4_ = jax.random.uniform(ks[5], (1, 4, 128, 128), dtype=jnp.float32)
    t4_ = jax.random.uniform(ks[6], (1, 4, 128, 128)) > 0.5
    check(dice_and_focal_loss(x4_, t4_, block_bytes=_CHUNK_ROWS * _LANE * 4),
          _reference(x4_, t4_.astype(jnp.float32)), "k-split")

    # 5) tile_r not dividing R -> in-kernel boundary-block row mask.
    x5_ = jax.random.uniform(ks[7], (2, 65, 32, 32), dtype=jnp.float32)
    t5_ = (jax.random.uniform(ks[8], (2, 65, 32, 32)) > 0.5).astype(jnp.float32)
    check(dice_and_focal_loss(x5_, t5_, block_bytes=_CHUNK_ROWS * _LANE * 4),
          _reference(x5_, t5_), "boundary-mask")

    print("KERNEL_OK")
</pallas_src>

<mosaic_0001>
module attributes {stable_mosaic.version = 11 : i64} {
  func.func @_dice_focal_kernel(%arg0: i32, %arg1: i32, %arg2: i32, %arg3: memref<1x8x128xf32, #tpu.memory_space<vmem>>, %arg4: memref<1x8x128xf32, #tpu.memory_space<vmem>>, %arg5: memref<1x3x8x128xf32, #tpu.memory_space<vmem>>, %arg6: memref<3x8x128xf32, #tpu.memory_space<vmem>>) attributes {dimension_semantics = [#tpu.dimension_semantics<parallel>, #tpu.dimension_semantics<parallel>, #tpu.dimension_semantics<arbitrary>], iteration_bounds = array<i64: 2, 1, 1>, scalar_prefetch = 0 : i64, scratch_operands = 1 : i64, tpu.core_type = #tpu.core_type<tc>, window_params = [{transform_indices = @transform_0, window_bounds = array<i64: 1, 8, 128>}, {transform_indices = @transform_1, window_bounds = array<i64: 1, 8, 128>}, {transform_indices = @transform_2, window_bounds = array<i64: 1, 3, 8, 128>}]} {
    %c0_i32 = arith.constant 0 : i32
    %0 = arith.cmpi eq, %arg2, %c0_i32 : i32
    %1 = arith.extui %0 : i1 to i32
    %c0_i32_0 = arith.constant 0 : i32
    %2 = arith.cmpi ne, %1, %c0_i32_0 : i32
    scf.if %2 {
      %cst_32 = arith.constant 0.000000e+00 : f32
      %59 = vector.broadcast %cst_32 : f32 to vector<3x8x128xf32>
      %c0_33 = arith.constant 0 : index
      %c0_34 = arith.constant 0 : index
      %c0_35 = arith.constant 0 : index
      %60 = vector.load %arg6[%c0_33, %c0_34, %c0_35] : memref<3x8x128xf32, #tpu.memory_space<vmem>>, vector<3x8x128xf32>
      tpu.vector_store %arg6[%c0_33, %c0_34, %c0_35], %59 {strides = array<i32>} : memref<3x8x128xf32, #tpu.memory_space<vmem>>, vector<3x8x128xf32>,
    } else {
    }
    %c0 = arith.constant 0 : index
    %c0_1 = arith.constant 0 : index
    %c0_2 = arith.constant 0 : index
    %3 = vector.load %arg3[%c0, %c0_1, %c0_2] : memref<1x8x128xf32, #tpu.memory_space<vmem>>, vector<1x8x128xf32>
    %4 = vector.shape_cast %3 : vector<1x8x128xf32> to vector<8x128xf32>
    %c0_3 = arith.constant 0 : index
    %c0_4 = arith.constant 0 : index
    %c0_5 = arith.constant 0 : index
    %5 = vector.load %arg4[%c0_3, %c0_4, %c0_5] : memref<1x8x128xf32, #tpu.memory_space<vmem>>, vector<1x8x128xf32>
    %6 = vector.shape_cast %5 : vector<1x8x128xf32> to vector<8x128xf32>
    %cst = arith.constant 1.000000e-03 : f32
    %cst_6 = arith.constant 9.990000e-01 : f32
    %7 = vector.broadcast %cst : f32 to vector<8x128xf32>
    %8 = arith.maximumf %7, %4 : vector<8x128xf32>
    %9 = vector.broadcast %cst_6 : f32 to vector<8x128xf32>
    %10 = arith.minimumf %9, %8 : vector<8x128xf32>
    %cst_7 = arith.constant 1.000000e+00 : f32
    %11 = vector.broadcast %cst_7 : f32 to vector<8x128xf32>
    %12 = arith.subf %11, %10 : vector<8x128xf32>
    %13 = arith.mulf %12, %12 : vector<8x128xf32>
    %14 = arith.mulf %6, %13 : vector<8x128xf32>
    %15 = math.log %10 : vector<8x128xf32>
    %16 = arith.mulf %14, %15 : vector<8x128xf32>
    %cst_8 = arith.constant 1.000000e+00 : f32
    %17 = vector.broadcast %cst_8 : f32 to vector<8x128xf32>
    %18 = arith.subf %17, %6 : vector<8x128xf32>
    %19 = arith.mulf %10, %10 : vector<8x128xf32>
    %20 = arith.mulf %18, %19 : vector<8x128xf32>
    %cst_9 = arith.constant 1.000000e+00 : f32
    %21 = vector.broadcast %cst_9 : f32 to vector<8x128xf32>
    %22 = arith.subf %21, %10 : vector<8x128xf32>
    %23 = math.log %22 : vector<8x128xf32>
    %24 = arith.mulf %20, %23 : vector<8x128xf32>
    %25 = arith.addf %16, %24 : vector<8x128xf32>
    %cst_10 = arith.constant 0.000000e+00 : f32
    %26 = vector.broadcast %cst_10 : f32 to vector<8x128xf32>
    %27 = arith.subf %26, %25 : vector<8x128xf32>
    %28 = arith.mulf %6, %6 : vector<8x128xf32>
    %c0_11 = arith.constant 0 : index
    %c0_12 = arith.constant 0 : index
    %c0_13 = arith.constant 0 : index
    %29 = vector.load %arg6[%c0_11, %c0_12, %c0_13] : memref<3x8x128xf32, #tpu.memory_space<vmem>>, vector<1x8x128xf32>
    %30 = vector.shape_cast %29 : vector<1x8x128xf32> to vector<8x128xf32>
    %31 = arith.mulf %4, %6 : vector<8x128xf32>
    %32 = vector.shape_cast %31 : vector<8x128xf32> to vector<1x8x128xf32>
    %cst_14 = arith.constant dense<0.000000e+00> : vector<8x128xf32>
    %33 = vector.multi_reduction <add>, %32, %cst_14 [0] : vector<1x8x128xf32> to vector<8x128xf32>
    %34 = arith.addf %30, %33 : vector<8x128xf32>
    %c0_15 = arith.constant 0 : index
    %c0_16 = arith.constant 0 : index
    %c0_17 = arith.constant 0 : index
    %35 = vector.load %arg6[%c0_15, %c0_16, %c0_17] : memref<3x8x128xf32, #tpu.memory_space<vmem>>, vector<1x8x128xf32>
    %36 = vector.shape_cast %35 : vector<1x8x128xf32> to vector<8x128xf32>
    %37 = vector.shape_cast %34 : vector<8x128xf32> to vector<1x8x128xf32>
    tpu.vector_store %arg6[%c0_15, %c0_16, %c0_17], %37 {strides = array<i32>} : memref<3x8x128xf32, #tpu.memory_space<vmem>>, vector<1x8x128xf32>,
    %c1 = arith.constant 1 : index
    %c0_18 = arith.constant 0 : index
    %c0_19 = arith.constant 0 : index
    %38 = vector.load %arg6[%c1, %c0_18, %c0_19] : memref<3x8x128xf32, #tpu.memory_space<vmem>>, vector<1x8x128xf32>
    %39 = vector.shape_cast %38 : vector<1x8x128xf32> to vector<8x128xf32>
    %40 = arith.mulf %4, %4 : vector<8x128xf32>
    %41 = arith.addf %40, %28 : vector<8x128xf32>
    %42 = vector.shape_cast %41 : vector<8x128xf32> to vector<1x8x128xf32>
    %cst_20 = arith.constant dense<0.000000e+00> : vector<8x128xf32>
    %43 = vector.multi_reduction <add>, %42, %cst_20 [0] : vector<1x8x128xf32> to vector<8x128xf32>
    %44 = arith.addf %39, %43 : vector<8x128xf32>
    %c1_21 = arith.constant 1 : index
    %c0_22 = arith.constant 0 : index
    %c0_23 = arith.constant 0 : index
    %45 = vector.load %arg6[%c1_21, %c0_22, %c0_23] : memref<3x8x128xf32, #tpu.memory_space<vmem>>, vector<1x8x128xf32>
    %46 = vector.shape_cast %45 : vector<1x8x128xf32> to vector<8x128xf32>
    %47 = vector.shape_cast %44 : vector<8x128xf32> to vector<1x8x128xf32>
    tpu.vector_store %arg6[%c1_21, %c0_22, %c0_23], %47 {strides = array<i32>} : memref<3x8x128xf32, #tpu.memory_space<vmem>>, vector<1x8x128xf32>,
    %c2 = arith.constant 2 : index
    %c0_24 = arith.constant 0 : index
    %c0_25 = arith.constant 0 : index
    %48 = vector.load %arg6[%c2, %c0_24, %c0_25] : memref<3x8x128xf32, #tpu.memory_space<vmem>>, vector<1x8x128xf32>
    %49 = vector.shape_cast %48 : vector<1x8x128xf32> to vector<8x128xf32>
    %50 = vector.shape_cast %27 : vector<8x128xf32> to vector<1x8x128xf32>
    %cst_26 = arith.constant dense<0.000000e+00> : vector<8x128xf32>
    %51 = vector.multi_reduction <add>, %50, %cst_26 [0] : vector<1x8x128xf32> to vector<8x128xf32>
    %52 = arith.addf %49, %51 : vector<8x128xf32>
    %c2_27 = arith.constant 2 : index
    %c0_28 = arith.constant 0 : index
    %c0_29 = arith.constant 0 : index
    %53 = vector.load %arg6[%c2_27, %c0_28, %c0_29] : memref<3x8x128xf32, #tpu.memory_space<vmem>>, vector<1x8x128xf32>
    %54 = vector.shape_cast %53 : vector<1x8x128xf32> to vector<8x128xf32>
    %55 = vector.shape_cast %52 : vector<8x128xf32> to vector<1x8x128xf32>
    tpu.vector_store %arg6[%c2_27, %c0_28, %c0_29], %55 {strides = array<i32>} : memref<3x8x128xf32, #tpu.memory_space<vmem>>, vector<1x8x128xf32>,
    %c0_i32_30 = arith.constant 0 : i32
    %56 = arith.cmpi eq, %arg2, %c0_i32_30 : i32
    %57 = arith.extui %56 : i1 to i32
    %c0_i32_31 = arith.constant 0 : i32
    %58 = arith.cmpi ne, %57, %c0_i32_31 : i32
    scf.if %58 {
      %c0_32 = arith.constant 0 : index
      %c0_33 = arith.constant 0 : index
      %c0_34 = arith.constant 0 : index
      %59 = vector.load %arg6[%c0_32, %c0_33, %c0_34] : memref<3x8x128xf32, #tpu.memory_space<vmem>>, vector<3x8x128xf32>
      %c0_35 = arith.constant 0 : index
      %c0_36 = arith.constant 0 : index
      %c0_37 = arith.constant 0 : index
      %c0_38 = arith.constant 0 : index
      %60 = vector.load %arg5[%c0_35, %c0_36, %c0_37, %c0_38] : memref<1x3x8x128xf32, #tpu.memory_space<vmem>>, vector<1x3x8x128xf32>
      %61 = vector.shape_cast %60 : vector<1x3x8x128xf32> to vector<3x8x128xf32>
      %62 = vector.shape_cast %59 : vector<3x8x128xf32> to vector<1x3x8x128xf32>
      tpu.vector_store %arg5[%c0_35, %c0_36, %c0_37, %c0_38], %62 {strides = array<i32>} : memref<1x3x8x128xf32, #tpu.memory_space<vmem>>, vector<1x3x8x128xf32>,
    } else {
    }
    return
  }
  func.func @transform_0(%arg0: i32, %arg1: i32, %arg2: i32) -> (i32, i32, i32) {
    %c1_i32 = arith.constant 1 : i32
    %0 = arith.muli %arg1, %c1_i32 : i32
    %1 = arith.addi %0, %arg2 : i32
    %c0_i32 = arith.constant 0 : i32
    %c0_i32_0 = arith.constant 0 : i32
    return %arg0, %1, %c0_i32 : i32, i32, i32
  }
  func.func @transform_1(%arg0: i32, %arg1: i32, %arg2: i32) -> (i32, i32, i32) {
    %c1_i32 = arith.constant 1 : i32
    %0 = arith.muli %arg1, %c1_i32 : i32
    %1 = arith.addi %0, %arg2 : i32
    %c0_i32 = arith.constant 0 : i32
    %c0_i32_0 = arith.constant 0 : i32
    return %arg0, %1, %c0_i32 : i32, i32, i32
  }
  func.func @transform_2(%arg0: i32, %arg1: i32, %arg2: i32) -> (i32, i32, i32, i32) {
    %c1_i32 = arith.constant 1 : i32
    %0 = arith.muli %arg0, %c1_i32 : i32
    %1 = arith.addi %0, %arg1 : i32
    %c0_i32 = arith.constant 0 : i32
    %c0_i32_0 = arith.constant 0 : i32
    %c0_i32_1 = arith.constant 0 : i32
    %c0_i32_2 = arith.constant 0 : i32
    return %1, %c0_i32, %c0_i32_0, %c0_i32_1 : i32, i32, i32, i32
  }
}

</mosaic_0001>

<llo_original>
// kernel: tpu_custom_call.1
$region0: #{tpu_custom_call.1}
  #allocation0 [shape = 'u32[]', space=smem, size = 0x4, offset = 0x4, fixed_abs, tag = 'smem constant byte address 0x4 - core index']
  #allocation1 [shape = 'u32[144,128]{1,0:T(1,128)}', space=vmem, size = 0x12000, scoped, tag = 'internal scratch']
  #allocation2 [shape = 'f32[3,8,128]{2,1,0:T(8,128)}', space=vmem, size = 0x3000, scoped, tag = 'scratch operand']
  %s0 = inlined_call_operand.hbm [shape: f32[2,8,128], index: 0, kind: input, shape index: {}]
  %s1 = inlined_call_operand.hbm [shape: f32[2,8,128], index: 1, kind: input, shape index: {}]
  %s2 = inlined_call_operand.hbm [shape: f32[2,3,8,128], index: 2, kind: output, shape index: {}]
  %s3 = sld [smem:[#allocation0]]
  $region57: #{tpu_custom_call.1} parent=0
    _
  %s5 = ssub.s32 1, %s3
  %s6 = scalar_select 0, %s5, %s3
  $region1: #{tpu_custom_call.1} parent=0
    #allocation3 [shape = 'u8[8192]{0}', space=vmem, size = 0x2000, scoped, tag = 'input window, operand 0']
    #allocation4 [shape = 's32[2]{0}', space=sflag, size = 0x8, scoped, tag = 'scoped memory for tpu_custom_call.1']
    #allocation5 [shape = 's32[2]{0}', space=sflag, size = 0x8, scoped, tag = 'scoped memory for tpu_custom_call.1']
    #allocation6 [shape = 'u8[8192]{0}', space=vmem, size = 0x2000, scoped, tag = 'input window, operand 1']
    #allocation7 [shape = 's32[2]{0}', space=sflag, size = 0x8, scoped, tag = 'scoped memory for tpu_custom_call.1']
    #allocation8 [shape = 'u8[24576]{0}', space=vmem, size = 0x6000, scoped, tag = 'output window, operand 0']
    %7 = vsyncpa [#allocation4], 0
    %s8 = scalar_lea.sflag [#allocation4], 1
    %9 = vsyncpa %s8, 0
    %10 = vsyncpa [#allocation7], 0
    %s11 = scalar_lea.sflag [#allocation7], 1
    %12 = vsyncpa %s11, 0
    %13 = vsyncpa [#allocation5], 0
    %s14 = scalar_lea.sflag [#allocation5], 1
    %15 = vsyncpa %s14, 0
    loop: start=0, step=1, limit=4
    $region2: #{tpu_custom_call.1} parent=1 // loop_pre_header
      _
    $region3: #{tpu_custom_call.1} parent=1 // loop_header
      %s17 = sphi 0, %s21
      %p18 = scmp.ge.s32.totalorder %s17, 4
      %s24 = sphi 0, %s43
      %s25 = sphi 0, %s39
      %s26 = sphi 0, %s35
      %s27 = sphi 0, %s24
      %s28 = sphi 0, %s25
      %s29 = sphi 0, %s26
      %s30 = sphi 0, %s27
      %s31 = sphi 0, %s28
      %s32 = sphi 0, %s29
      %s50 = sphi 0, %s52
      %s53 = sphi 0, %s50
      %s54 = sphi 0, %s53
      %s70 = sphi 0, %s54
      %s80 = sphi 0, %s82
      %s83 = sphi 0, %s80
      %s84 = sphi 0, %s83
      %s100 = sphi 0, %s84
      %s108 = sphi 0, %s110
      %s111 = sphi 0, %s108
      %s112 = sphi 0, %s111
      %s128 = sphi 0, %s112
    $region4: #{tpu_custom_call.1} parent=1 // loop_header_branch
      %20 = sbr.rel (%p18) target = $region8
    $region5: #{tpu_custom_call.1} parent=1 // loop_body
      %s22 = ssub.s32 %s17, 1
      %s23 = ssub.s32 %s17, 2
      %s33 = sadd.s32 1, %s26
      %p34 = scmp.ge.s32.totalorder %s33, 1
      %s35 = scalar_select %p34, 0, %s33
      %s36 = sadd.s32 1, %s25
      %s37 = scalar_select %p34, %s36, %s25
      %p38 = scmp.ge.s32.totalorder %s37, 1
      %s39 = scalar_select %p38, 0, %s37
      %s40 = sadd.s32 1, %s24
      %s41 = scalar_select %p38, %s40, %s24
      %p42 = scmp.ge.s32.totalorder %s41, 2
      %s43 = scalar_select %p42, 0, %s41
      %s44 = sadd.s32 %s25, %s26
      %s45 = sadd.s32 %s39, %s35
      %s46 = ssub.s32 %s24, %s43
      %s47 = ssub.s32 %s44, %s45
      %s48 = sor.u32 %s46, %s47
      %p49 = scmp.eq.s32.totalorder %s48, 0
      %s51 = sadd.s32 %s50, 1
      %s52 = scalar_select %p49, %s50, %s51
      %p55 = pneg %p49
      %p56 = scmp.eq.s32.totalorder %s17, 1
      %p57 = por %p55, %p56
      %p58 = scmp.ne.s32.totalorder %s50, %s53
      %p59 = scmp.eq.s32.totalorder %s17, 0
      %p60 = por %p58, %p59
      %p61 = scmp.ne.s32.totalorder %s50, %s53
      %p62 = scmp.eq.s32.totalorder %s22, 1
      %p63 = por %p61, %p62
      %p64 = scmp.ne.s32.totalorder %s53, %s54
      %p65 = scmp.eq.s32.totalorder %s22, 0
      %p66 = por %p64, %p65
      %p67 = scmp.ne.s32.totalorder %s53, %s54
      %p68 = scmp.eq.s32.totalorder %s23, 1
      %p69 = por %p67, %p68
      %p71 = scmp.ne.s32.totalorder %s54, %s70
      %p72 = scmp.eq.s32.totalorder %s23, 0
      %p73 = por %p71, %p72
      %s74 = sadd.s32 %s25, %s26
      %s75 = sadd.s32 %s39, %s35
      %s76 = ssub.s32 %s24, %s43
      %s77 = ssub.s32 %s74, %s75
      %s78 = sor.u32 %s76, %s77
      %p79 = scmp.eq.s32.totalorder %s78, 0
      %s81 = sadd.s32 %s80, 1
      %s82 = scalar_select %p79, %s80, %s81
      %p85 = pneg %p79
      %p86 = scmp.eq.s32.totalorder %s17, 1
      %p87 = por %p85, %p86
      %p88 = scmp.ne.s32.totalorder %s80, %s83
      %p89 = scmp.eq.s32.totalorder %s17, 0
      %p90 = por %p88, %p89
      %p91 = scmp.ne.s32.totalorder %s80, %s83
      %p92 = scmp.eq.s32.totalorder %s22, 1
      %p93 = por %p91, %p92
      %p94 = scmp.ne.s32.totalorder %s83, %s84
      %p95 = scmp.eq.s32.totalorder %s22, 0
      %p96 = por %p94, %p95
      %p97 = scmp.ne.s32.totalorder %s83, %s84
      %p98 = scmp.eq.s32.totalorder %s23, 1
      %p99 = por %p97, %p98
      %p101 = scmp.ne.s32.totalorder %s84, %s100
      %p102 = scmp.eq.s32.totalorder %s23, 0
      %p103 = por %p101, %p102
      %s104 = sadd.s32 %s24, %s25
      %s105 = sadd.s32 %s43, %s39
      %s106 = ssub.s32 %s104, %s105
      %p107 = scmp.eq.s32.totalorder %s106, 0
      %s109 = sadd.s32 %s108, 1
      %s110 = scalar_select %p107, %s108, %s109
      %p113 = pneg %p107
      %p114 = scmp.eq.s32.totalorder %s17, 1
      %p115 = por %p113, %p114
      %p116 = scmp.ne.s32.totalorder %s108, %s111
      %p117 = scmp.eq.s32.totalorder %s17, 0
      %p118 = por %p116, %p117
      %p119 = scmp.ne.s32.totalorder %s108, %s111
      %p120 = scmp.eq.s32.totalorder %s22, 1
      %p121 = por %p119, %p120
      %p122 = scmp.ne.s32.totalorder %s111, %s112
      %p123 = scmp.eq.s32.totalorder %s22, 0
      %p124 = por %p122, %p123
      %p125 = scmp.ne.s32.totalorder %s111, %s112
      %p126 = scmp.eq.s32.totalorder %s23, 1
      %p127 = por %p125, %p126
      %p129 = scmp.ne.s32.totalorder %s112, %s128
      %p130 = scmp.eq.s32.totalorder %s23, 0
      %p131 = por %p129, %p130
      %p132 = scmp.le.s32.totalorder 1, %s17
      %p133 = scmp.lt.s32.totalorder %s17, 3
      %p134 = pnand %p132, %p133
      %p135 = pneg %p134
      // Predicated region
      $region9: #{tpu_custom_call.1} parent=5 // pred_check
        _
      $region10: #{tpu_custom_call.1} parent=5 // pred_check_branch
        %137 = sbr.rel (%p134) target = $region12
      $region11: #{tpu_custom_call.1} parent=5 // pred_region
        %s138 = ssub.s32 %s17, 1
      $region12: #{tpu_custom_call.1} parent=5 // pred_fallthru
        _
      %p139 = scmp.lt.s32.totalorder %s17, 2
      // Predicated region
      $region13: #{tpu_custom_call.1} parent=5 // pred_check
        %p140 = pneg %p139
      $region14: #{tpu_custom_call.1} parent=5 // pred_check_branch
        %142 = sbr.rel (%p140) target = $region16
      $region15: #{tpu_custom_call.1} parent=5 // pred_region
        // Predicated region
        $region17: #{tpu_custom_call.1} parent=15 // pred_check
          %p143 = pneg %p60
        $region18: #{tpu_custom_call.1} parent=15 // pred_check_branch
          %145 = sbr.rel (%p143) target = $region20
        $region19: #{tpu_custom_call.1} parent=15 // pred_region
          %s146 = sand.u32 %s50, 1
          %s147 = scalar_lea.sflag [#allocation4], %s146
          %s148 = sand.u32 %s50, 1
          %s149 = smul.addr %s148, 8
          %s150 = scalar_lea.vmem [#allocation3], %s149
          %s151 = sadd.s32 %s25, %s26
          %s153 = ssub.s32 128, 128
          %154 = vsyncadd %s147, %s153
          %s155 = sadd.s32 %s151, %s24
          %s156 = smul.addr %s155, 128
          %s157 = scalar_lea.hbm %s0, %s156
          %s159 = sshll.u32 %s150, 4
          %s160 = int_to_ptr.vmem [resolvable:$true] %s159
          %162 = dma.hbm_to_vmem [thread:$0]  %s157, 128, %s160, %s147
        $region20: #{tpu_custom_call.1} parent=15 // pred_fallthru
          _
        // Predicated region
        $region21: #{tpu_custom_call.1} parent=15 // pred_check
          %p163 = pneg %p90
        $region22: #{tpu_custom_call.1} parent=15 // pred_check_branch
          %165 = sbr.rel (%p163) target = $region24
        $region23: #{tpu_custom_call.1} parent=15 // pred_region
          %s166 = sand.u32 %s80, 1
          %s167 = scalar_lea.sflag [#allocation7], %s166
          %s168 = sand.u32 %s80, 1
          %s169 = smul.addr %s168, 8
          %s170 = scalar_lea.vmem [#allocation6], %s169
          %s171 = sadd.s32 %s25, %s26
          %s173 = ssub.s32 128, 128
          %174 = vsyncadd %s167, %s173
          %s175 = sadd.s32 %s171, %s24
          %s176 = smul.addr %s175, 128
          %s177 = scalar_lea.hbm %s1, %s176
          %s179 = sshll.u32 %s170, 4
          %s180 = int_to_ptr.vmem [resolvable:$true] %s179
          %182 = dma.hbm_to_vmem [thread:$0]  %s177, 128, %s180, %s167
        $region24: #{tpu_custom_call.1} parent=15 // pred_fallthru
          _
      $region16: #{tpu_custom_call.1} parent=5 // pred_fallthru
        _
      %p183 = scmp.le.s32.totalorder 1, %s17
      %p184 = scmp.lt.s32.totalorder %s17, 3
      %p185 = pnand %p183, %p184
      %p186 = pneg %p185
      // Predicated region
      $region25: #{tpu_custom_call.1} parent=5 // pred_check
        _
      $region26: #{tpu_custom_call.1} parent=5 // pred_check_branch
        %188 = sbr.rel (%p185) target = $region28
      $region27: #{tpu_custom_call.1} parent=5 // pred_region
        %s189 = ssub.s32 %s17, 1
        %s190 = sand.u32 %s53, 1
        %s191 = scalar_lea.sflag [#allocation4], %s190
        %s192 = sand.u32 %s53, 1
        %s193 = smul.addr %s192, 8
        %s194 = scalar_lea.vmem [#allocation3], %s193
        // Predicated region
        $region29: #{tpu_custom_call.1} parent=27 // pred_check
          %p195 = pneg %p66
        $region30: #{tpu_custom_call.1} parent=27 // pred_check_branch
          %197 = sbr.rel (%p195) target = $region32
        $region31: #{tpu_custom_call.1} parent=27 // pred_region
          %198 = dma.done %s191, 128
        $region32: #{tpu_custom_call.1} parent=27 // pred_fallthru
          _
        %s199 = sand.u32 %s83, 1
        %s200 = scalar_lea.sflag [#allocation7], %s199
        %s201 = sand.u32 %s83, 1
        %s202 = smul.addr %s201, 8
        %s203 = scalar_lea.vmem [#allocation6], %s202
        // Predicated region
        $region33: #{tpu_custom_call.1} parent=27 // pred_check
          %p204 = pneg %p96
        $region34: #{tpu_custom_call.1} parent=27 // pred_check_branch
          %206 = sbr.rel (%p204) target = $region36
        $region35: #{tpu_custom_call.1} parent=27 // pred_region
          %207 = dma.done %s200, 128
        $region36: #{tpu_custom_call.1} parent=27 // pred_fallthru
          _
        %s208 = sand.u32 %s53, 1
        %s209 = scalar_lea.sflag [#allocation4], %s208
        %s210 = sand.u32 %s53, 1
        %s211 = smul.addr %s210, 8
        %s212 = scalar_lea.vmem [#allocation3], %s211
        %p213 = pneg %p66
        %p214 = pneg %p63
        %s215 = sand.u32 %s83, 1
        %s216 = scalar_lea.sflag [#allocation7], %s215
        %s217 = sand.u32 %s83, 1
        %s218 = smul.addr %s217, 8
        %s219 = scalar_lea.vmem [#allocation6], %s218
        %p220 = pneg %p96
        %p221 = pneg %p93
        %p222 = pneg %p124
        %p223 = pneg %p121
        %s224 = sand.u32 %s111, 1
        %s225 = scalar_lea.sflag [#allocation5], %s224
        %s226 = sand.u32 %s111, 1
        %s227 = smul.addr %s226, 24
        %s228 = scalar_lea.vmem [#allocation8], %s227
        %s229 = sadd.s32 %s28, %s29
        %s230 = sadd.s32 %s28, %s29
        %s231 = sadd.s32 %s27, %s28
        %p232 = scmp.eq.s32.totalorder %s29, 0
        // Predicated region
        $region37: #{tpu_custom_call.1} parent=27 // pred_check
          %p233 = pneg %p232
        $region38: #{tpu_custom_call.1} parent=27 // pred_check_branch
          %235 = sbr.rel (%p233) target = $region40
        $region39: #{tpu_custom_call.1} parent=27 // pred_region
          %236 = vst [vmem:[#allocation2] sm:$0xff] 0.0
          %237 = vst [vmem:[#allocation2 + $0x8] sm:$0xff] 0.0
          %238 = vst [vmem:[#allocation2 + $0x10] sm:$0xff] 0.0
        $region40: #{tpu_custom_call.1} parent=27 // pred_fallthru
          _
        %v239 = vld [vmem:[%s194] sm:$0xff]
        %v240 = vld [vmem:[%s203] sm:$0xff]
        %v241 = vmax.f32 %v239, 0.001
        %v242 = vmin.f32 %v241, 0.999
        %v243 = vsub.f32 1.0, %v242
        %v244 = vmul.f32 %v243, %v243
        %v245 = vmul.f32 %v240, %v244
        %v246 = vlog2.pop %v242
        %v247 = vmul.f32 %v246, 0.6931472
        %v248 = vmul.f32 %v245, %v247
        %v249 = vsub.f32 1.0, %v240
        %v250 = vmul.f32 %v242, %v242
        %v251 = vmul.f32 %v249, %v250
        %v252 = vlog2.pop %v243
        %v253 = vmul.f32 %v252, 0.6931472
        %v254 = vmul.f32 %v251, %v253
        %v255 = vadd.f32 %v248, %v254
        %v256 = vsub.f32 0.0, %v255
        %v257 = vmul.f32 %v240, %v240
        %v258 = vld [vmem:[#allocation2] sm:$0xff]
        %v259 = vmul.f32 %v239, %v240
        %v260 = vadd.f32 %v259, 0.0
        %v261 = vadd.f32 %v258, %v260
        %262 = vst [vmem:[#allocation2] sm:$0xff] %v261
        %s263 = scalar_lea.vmem [#allocation2], 8
        %v264 = vld [vmem:[%s263] sm:$0xff]
        %v265 = vmul.f32 %v239, %v239
        %v266 = vadd.f32 %v265, %v257
        %v267 = vadd.f32 %v266, 0.0
        %v268 = vadd.f32 %v264, %v267
        %269 = vst [vmem:[%s263] sm:$0xff] %v268
        %s270 = scalar_lea.vmem [#allocation2], 16
        %v271 = vld [vmem:[%s270] sm:$0xff]
        %v272 = vadd.f32 %v256, 0.0
        %v273 = vadd.f32 %v271, %v272
        %274 = vst [vmem:[%s270] sm:$0xff] %v273
        // Predicated region
        $region41: #{tpu_custom_call.1} parent=27 // pred_check
          %p275 = pneg %p232
        $region42: #{tpu_custom_call.1} parent=27 // pred_check_branch
          %277 = sbr.rel (%p275) target = $region44
        $region43: #{tpu_custom_call.1} parent=27 // pred_region
          %v278 = vld [vmem:[#allocation2] sm:$0xff]
          %v279 = vld [vmem:[#allocation2 + $0x8] sm:$0xff]
          %v280 = vld [vmem:[#allocation2 + $0x10] sm:$0xff]
          %281 = vst [vmem:[%s228] sm:$0xff] %v278
          %282 = vst [vmem:[%s228 + $0x8] sm:$0xff] %v279
          %283 = vst [vmem:[%s228 + $0x10] sm:$0xff] %v280
        $region44: #{tpu_custom_call.1} parent=27 // pred_fallthru
          _
        %s284 = sand.u32 %s111, 1
        %s285 = scalar_lea.sflag [#allocation5], %s284
        %s286 = sand.u32 %s111, 1
        %s287 = smul.addr %s286, 24
        %s288 = scalar_lea.vmem [#allocation8], %s287
        // Predicated region
        $region45: #{tpu_custom_call.1} parent=27 // pred_check
          %p289 = pneg %p121
        $region46: #{tpu_custom_call.1} parent=27 // pred_check_branch
          %291 = sbr.rel (%p289) target = $region48
        $region47: #{tpu_custom_call.1} parent=27 // pred_region
          %s292 = sadd.s32 %s27, %s28
          %s294 = ssub.s32 384, 384
          %295 = vsyncadd %s285, %s294
          %s296 = smul.addr %s292, 3
          %s297 = smul.addr %s296, 128
          %s298 = scalar_lea.hbm %s2, %s297
          %s299 = sshll.u32 %s288, 4
          %s300 = int_to_ptr.vmem [resolvable:$true] %s299
          %305 = dma.vmem_to_hbm [thread:$0]  %s300, 384, %s298, %s285, 128, 128, 8
        $region48: #{tpu_custom_call.1} parent=27 // pred_fallthru
          _
      $region28: #{tpu_custom_call.1} parent=5 // pred_fallthru
        _
      %p306 = scmp.le.s32.totalorder 2, %s17
      // Predicated region
      $region49: #{tpu_custom_call.1} parent=5 // pred_check
        %p307 = pneg %p306
      $region50: #{tpu_custom_call.1} parent=5 // pred_check_branch
        %309 = sbr.rel (%p307) target = $region52
      $region51: #{tpu_custom_call.1} parent=5 // pred_region
        %s310 = ssub.s32 %s17, 2
        // Predicated region
        $region53: #{tpu_custom_call.1} parent=51 // pred_check
          %p311 = pneg %p127
        $region54: #{tpu_custom_call.1} parent=51 // pred_check_branch
          %313 = sbr.rel (%p311) target = $region56
        $region55: #{tpu_custom_call.1} parent=51 // pred_region
          %s314 = sand.u32 %s112, 1
          %s315 = scalar_lea.sflag [#allocation5], %s314
          %s316 = sand.u32 %s112, 1
          %s317 = smul.addr %s316, 24
          %s318 = scalar_lea.vmem [#allocation8], %s317
          %319 = dma.done %s315, 384
        $region56: #{tpu_custom_call.1} parent=51 // pred_fallthru
          _
      $region52: #{tpu_custom_call.1} parent=5 // pred_fallthru
        _
    $region6: #{tpu_custom_call.1} parent=1 // loop_footer
      %s21 = sadd.s32 1, %s17
    $region7: #{tpu_custom_call.1} parent=1 // loop_footer_branch
      %16 = sbr.rel target = $region3
    $region8: #{tpu_custom_call.1} parent=1 // loop_exit
      _
    %320 = vsyncpa [#allocation4], 1
    %s321 = scalar_lea.sflag [#allocation4], 1
    %322 = vsyncpa %s321, 1
    %323 = vsyncpa [#allocation7], 1
    %s324 = scalar_lea.sflag [#allocation7], 1
    %325 = vsyncpa %s324, 1
    %326 = vsyncpa [#allocation5], 1
    %s327 = scalar_lea.sflag [#allocation5], 1
    %328 = vsyncpa %s327, 1

</llo_original>
